<compile_context>
chip_gen: v7x
topology: tpu7x:2x2x1
jax: 0.10.0
libtpu: 0.0.40
codegen_flags: <defaults>
</compile_context>

<pallas_src>
import jax
import jax.numpy as jnp
from jax.experimental import pallas as pl
from jax.experimental.pallas import tpu as pltpu

IN_F, HID_F, OUT_F = 3, 2, 1
_LANE = 128
_MAX_BLOCK_B = 32768          # lane-columns per grid step (~384 KiB x + 128 KiB out, f32)
_MIN_PALLAS_BATCH = 1024      # below this, plain jnp (fused by XLA) beats a kernel launch

# Packed parameter layout (flat f32[11], lives in SMEM inside the kernel):
#   [0:3]  = W1[:, 0]   (input weights of hidden unit 0)
#   [3:6]  = W1[:, 1]   (input weights of hidden unit 1)
#   [6:8]  = b1
#   [8:10] = W2[:, 0]   (output weights)
#   [10]   = b2


def mlp_kernel(p_ref, x_ref, o_ref):
    # p_ref: (11,)        f32 SMEM  (all weights/biases as scalars)
    # x_ref: (IN_F, TB)   f32 VMEM  (batch on the lane axis)
    # o_ref: (OUT_F, TB)  f32 VMEM
    x0 = x_ref[0:1, :]                          # (1, TB)
    x1 = x_ref[1:2, :]
    x2 = x_ref[2:3, :]

    # hidden_j = relu(W1[0,j]*x0 + W1[1,j]*x1 + W1[2,j]*x2 + b1[j])  -- scalar-broadcast FMAs
    h0 = p_ref[0] * x0 + p_ref[1] * x1 + p_ref[2] * x2 + p_ref[6]
    h1 = p_ref[3] * x0 + p_ref[4] * x1 + p_ref[5] * x2 + p_ref[7]
    a0 = jnp.maximum(h0, 0.0)
    a1 = jnp.maximum(h1, 0.0)

    # out = a0 * W2[0,0] + a1 * W2[1,0] + b2[0]
    o_ref[...] = a0 * p_ref[8] + a1 * p_ref[9] + p_ref[10]


def prepare_params(w1, b1, w2, b2):
    """One-time prep (outside the hot path): pack everything into a flat f32[11]."""
    return jnp.concatenate([
        jnp.asarray(w1, jnp.float32).T.reshape(-1),   # (6,)  W1[:,0], W1[:,1]
        jnp.asarray(b1, jnp.float32).reshape(-1),     # (2,)
        jnp.asarray(w2, jnp.float32).reshape(-1),     # (2,)
        jnp.asarray(b2, jnp.float32).reshape(-1),     # (1,)
    ])


def _mlp_jnp_t(xt, packed):
    """Plain-jnp reference in the transposed layout: xt (IN_F, n) -> (OUT_F, n)."""
    w1t = packed[0:6].reshape(HID_F, IN_F)       # row j = W1[:, j]
    b1 = packed[6:8].reshape(HID_F, 1)
    w2r = packed[8:10].reshape(OUT_F, HID_F)     # (1, 2)
    b2 = packed[10]
    h = jnp.maximum(w1t @ xt + b1, 0.0)
    return w2r @ h + b2


def _pick_block_b(n_cols):
    """Lane-dense tile width: multiple of 128, as large as reasonable, >= 2 grid steps
    when the batch allows it (v7x megacore sharding)."""
    tb = _MAX_BLOCK_B
    if n_cols < 2 * tb:
        tb = max(_LANE, (n_cols // 2) // _LANE * _LANE)
    return tb


def _mlp_pallas_t(xt, packed, tb):
    """xt: (IN_F, n) with n % tb == 0 -> (OUT_F, n)."""
    _, n = xt.shape
    assert n % tb == 0 and tb % _LANE == 0
    smem = pl.BlockSpec(memory_space=pltpu.MemorySpace.SMEM)
    return pl.pallas_call(
        mlp_kernel,
        out_shape=jax.ShapeDtypeStruct((OUT_F, n), jnp.float32),
        grid=(n // tb,),
        in_specs=[
            smem,                                          # packed params (scalars)
            pl.BlockSpec((IN_F, tb), lambda i: (0, i)),    # x, batch tiled on lanes
        ],
        out_specs=pl.BlockSpec((OUT_F, tb), lambda i: (0, i)),
        compiler_params=pltpu.CompilerParams(
            dimension_semantics=("parallel",),
        ),
    )(packed, xt)


def mlp_forward_t(xt, packed, *, block_b=None):
    """Preferred production entry point: xt already in lane-dense (IN_F, B) layout.
    Returns (OUT_F, B). Full tiles go through Pallas; the < TB remainder (if any) is
    computed with plain jnp instead of padding the whole input."""
    xt = jnp.asarray(xt, jnp.float32)
    _, B = xt.shape
    tb = block_b if block_b is not None else _pick_block_b(B)
    n_full = (B // tb) * tb
    if n_full == 0:
        return _mlp_jnp_t(xt, packed)
    out_main = _mlp_pallas_t(xt[:, :n_full], packed, tb)
    if n_full == B:
        return out_main
    out_tail = _mlp_jnp_t(xt[:, n_full:], packed)
    return jnp.concatenate([out_main, out_tail], axis=1)


def mlp_forward(x, packed, *, min_pallas_batch=_MIN_PALLAS_BATCH, block_b=None):
    """x: (B, IN_F) float32 -> (B, OUT_F), same math as the PyTorch MLP.forward.
    Tiny batches take the fused plain-jnp path (cheaper than a kernel launch).
    Large batches are transposed once to the lane-dense layout; callers that can
    produce (IN_F, B) directly should use mlp_forward_t and skip the transpose."""
    x = jnp.asarray(x, jnp.float32)
    B = x.shape[0]
    if B < min_pallas_batch:
        return _mlp_jnp_t(x.T, packed).T
    return mlp_forward_t(x.T, packed, block_b=block_b).T


def init_params(key):
    """torch.nn.Linear-style init: U(-1/sqrt(fan_in), +1/sqrt(fan_in))."""
    k1, k2, k3, k4 = jax.random.split(key, 4)
    bound1 = 1.0 / jnp.sqrt(jnp.float32(IN_F))
    bound2 = 1.0 / jnp.sqrt(jnp.float32(HID_F))
    w1 = jax.random.uniform(k1, (IN_F, HID_F), jnp.float32, -bound1, bound1)
    b1 = jax.random.uniform(k2, (HID_F,), jnp.float32, -bound1, bound1)
    w2 = jax.random.uniform(k3, (HID_F, OUT_F), jnp.float32, -bound2, bound2)
    b2 = jax.random.uniform(k4, (OUT_F,), jnp.float32, -bound2, bound2)
    return w1, b1, w2, b2


if __name__ == "__main__":
    key = jax.random.PRNGKey(0)
    w1, b1, w2, b2 = init_params(key)
    packed = jax.block_until_ready(prepare_params(w1, b1, w2, b2))

    def ref_fn(x):
        return jnp.maximum(x @ w1 + b1, 0.0) @ w2 + b2

    # 1) Spec-sized input (the script uses x = torch.ones(3)): tiny batch of ones.
    #    Small batches take the fused plain-jnp fast path; identical math.
    x_small = jnp.ones((2, IN_F), dtype=jnp.float32)
    out_small = jax.block_until_ready(mlp_forward(x_small, packed))
    assert out_small.shape == (2, OUT_F)
    assert jnp.allclose(out_small, ref_fn(x_small), atol=1e-5, rtol=1e-5)

    # 2) Batch large enough to use the Pallas kernel: 2 lane-dense tiles, exact fit.
    xb = jax.random.normal(jax.random.PRNGKey(1), (4096, IN_F), jnp.float32)
    out_b = jax.block_until_ready(mlp_forward(xb, packed))
    assert out_b.shape == (4096, OUT_F)
    assert jnp.allclose(out_b, ref_fn(xb), atol=1e-5, rtol=1e-5)

    # 3) Ragged batch: full tiles through Pallas + small jnp tail (no full-x pad).
    xc = jax.random.normal(jax.random.PRNGKey(2), (4096 + 37, IN_F), jnp.float32)
    out_c = jax.block_until_ready(mlp_forward(xc, packed))
    assert out_c.shape == (4096 + 37, OUT_F)
    assert jnp.allclose(out_c, ref_fn(xc), atol=1e-5, rtol=1e-5)

    print("KERNEL_OK")
</pallas_src>

<mosaic_0001>
module attributes {stable_mosaic.version = 11 : i64} {
  func.func @mlp_kernel(%arg0: i32, %arg1: memref<11xf32, #tpu.memory_space<smem>>, %arg2: memref<3x2048xf32, #tpu.memory_space<vmem>>, %arg3: memref<1x2048xf32, #tpu.memory_space<vmem>>) attributes {dimension_semantics = [#tpu.dimension_semantics<parallel>], iteration_bounds = array<i64: 2>, scalar_prefetch = 0 : i64, scratch_operands = 0 : i64, tpu.core_type = #tpu.core_type<tc>, window_params = [{transform_indices = @transform_0, window_bounds = array<i64: 11>}, {transform_indices = @transform_1, window_bounds = array<i64: 3, 2048>}, {transform_indices = @transform_2, window_bounds = array<i64: 1, 2048>}]} {
    %c0 = arith.constant 0 : index
    %c0_0 = arith.constant 0 : index
    %0 = vector.load %arg2[%c0, %c0_0] : memref<3x2048xf32, #tpu.memory_space<vmem>>, vector<1x2048xf32>
    %c1 = arith.constant 1 : index
    %c0_1 = arith.constant 0 : index
    %1 = vector.load %arg2[%c1, %c0_1] : memref<3x2048xf32, #tpu.memory_space<vmem>>, vector<1x2048xf32>
    %c2 = arith.constant 2 : index
    %c0_2 = arith.constant 0 : index
    %2 = vector.load %arg2[%c2, %c0_2] : memref<3x2048xf32, #tpu.memory_space<vmem>>, vector<1x2048xf32>
    %c0_3 = arith.constant 0 : index
    %3 = memref.load %arg1[%c0_3] : memref<11xf32, #tpu.memory_space<smem>>
    %4 = vector.broadcast %3 : f32 to vector<1x2048xf32>
    %5 = arith.mulf %4, %0 : vector<1x2048xf32>
    %c1_4 = arith.constant 1 : index
    %6 = memref.load %arg1[%c1_4] : memref<11xf32, #tpu.memory_space<smem>>
    %7 = vector.broadcast %6 : f32 to vector<1x2048xf32>
    %8 = arith.mulf %7, %1 : vector<1x2048xf32>
    %9 = arith.addf %5, %8 : vector<1x2048xf32>
    %c2_5 = arith.constant 2 : index
    %10 = memref.load %arg1[%c2_5] : memref<11xf32, #tpu.memory_space<smem>>
    %11 = vector.broadcast %10 : f32 to vector<1x2048xf32>
    %12 = arith.mulf %11, %2 : vector<1x2048xf32>
    %13 = arith.addf %9, %12 : vector<1x2048xf32>
    %c6 = arith.constant 6 : index
    %14 = memref.load %arg1[%c6] : memref<11xf32, #tpu.memory_space<smem>>
    %15 = vector.broadcast %14 : f32 to vector<1x2048xf32>
    %16 = arith.addf %13, %15 : vector<1x2048xf32>
    %c3 = arith.constant 3 : index
    %17 = memref.load %arg1[%c3] : memref<11xf32, #tpu.memory_space<smem>>
    %18 = vector.broadcast %17 : f32 to vector<1x2048xf32>
    %19 = arith.mulf %18, %0 : vector<1x2048xf32>
    %c4 = arith.constant 4 : index
    %20 = memref.load %arg1[%c4] : memref<11xf32, #tpu.memory_space<smem>>
    %21 = vector.broadcast %20 : f32 to vector<1x2048xf32>
    %22 = arith.mulf %21, %1 : vector<1x2048xf32>
    %23 = arith.addf %19, %22 : vector<1x2048xf32>
    %c5 = arith.constant 5 : index
    %24 = memref.load %arg1[%c5] : memref<11xf32, #tpu.memory_space<smem>>
    %25 = vector.broadcast %24 : f32 to vector<1x2048xf32>
    %26 = arith.mulf %25, %2 : vector<1x2048xf32>
    %27 = arith.addf %23, %26 : vector<1x2048xf32>
    %c7 = arith.constant 7 : index
    %28 = memref.load %arg1[%c7] : memref<11xf32, #tpu.memory_space<smem>>
    %29 = vector.broadcast %28 : f32 to vector<1x2048xf32>
    %30 = arith.addf %27, %29 : vector<1x2048xf32>
    %cst = arith.constant 0.000000e+00 : f32
    %31 = vector.broadcast %cst : f32 to vector<1x2048xf32>
    %32 = arith.maximumf %16, %31 : vector<1x2048xf32>
    %cst_6 = arith.constant 0.000000e+00 : f32
    %33 = vector.broadcast %cst_6 : f32 to vector<1x2048xf32>
    %34 = arith.maximumf %30, %33 : vector<1x2048xf32>
    %c8 = arith.constant 8 : index
    %35 = memref.load %arg1[%c8] : memref<11xf32, #tpu.memory_space<smem>>
    %36 = vector.broadcast %35 : f32 to vector<1x2048xf32>
    %37 = arith.mulf %32, %36 : vector<1x2048xf32>
    %c9 = arith.constant 9 : index
    %38 = memref.load %arg1[%c9] : memref<11xf32, #tpu.memory_space<smem>>
    %39 = vector.broadcast %38 : f32 to vector<1x2048xf32>
    %40 = arith.mulf %34, %39 : vector<1x2048xf32>
    %41 = arith.addf %37, %40 : vector<1x2048xf32>
    %c10 = arith.constant 10 : index
    %42 = memref.load %arg1[%c10] : memref<11xf32, #tpu.memory_space<smem>>
    %43 = vector.broadcast %42 : f32 to vector<1x2048xf32>
    %44 = arith.addf %41, %43 : vector<1x2048xf32>
    %c0_7 = arith.constant 0 : index
    %c0_8 = arith.constant 0 : index
    %45 = vector.load %arg3[%c0_7, %c0_8] : memref<1x2048xf32, #tpu.memory_space<vmem>>, vector<1x2048xf32>
    tpu.vector_store %arg3[%c0_7, %c0_8], %44 {strides = array<i32>} : memref<1x2048xf32, #tpu.memory_space<vmem>>, vector<1x2048xf32>,
    return
  }
  func.func @transform_0(%arg0: i32) -> i32 {
    %c0_i32 = arith.constant 0 : i32
    %c0_i32_0 = arith.constant 0 : i32
    return %c0_i32 : i32
  }
  func.func @transform_1(%arg0: i32) -> (i32, i32) {
    %c0_i32 = arith.constant 0 : i32
    %c0_i32_0 = arith.constant 0 : i32
    return %c0_i32, %arg0 : i32, i32
  }
  func.func @transform_2(%arg0: i32) -> (i32, i32) {
    %c0_i32 = arith.constant 0 : i32
    %c0_i32_0 = arith.constant 0 : i32
    return %c0_i32, %arg0 : i32, i32
  }
}

</mosaic_0001>

<llo_original>
// kernel: tpu_custom_call.1
$region0: #{tpu_custom_call.1}
  #allocation0 [shape = 'u32[]', space=smem, size = 0x4, offset = 0x4, fixed_abs, tag = 'smem constant byte address 0x4 - core index']
  #allocation1 [shape = 'u32[144,128]{1,0:T(1,128)}', space=vmem, size = 0x12000, scoped, tag = 'internal scratch']
  %s0 = inlined_call_operand.hbm [shape: f32[11], index: 0, kind: input, shape index: {}]
  %s1 = inlined_call_operand.hbm [shape: f32[3,4096], index: 1, kind: input, shape index: {}]
  %s2 = inlined_call_operand.hbm [shape: f32[1,4096], index: 2, kind: output, shape index: {}]
  %s3 = sld [smem:[#allocation0]]
  $region49: #{tpu_custom_call.1} parent=0
    _
  %s5 = ssub.s32 1, %s3
  %s6 = scalar_select 0, %s5, %s3
  $region1: #{tpu_custom_call.1} parent=0
    #allocation2 [shape = 'u8[512]{0}', space=smem, size = 0x200, scoped, tag = 'input window, operand 0, single buffered']
    #allocation3 [shape = 's32[2]{0}', space=sflag, size = 0x8, scoped, tag = 'scoped memory for tpu_custom_call.1']
    #allocation4 [shape = 's32[2]{0}', space=sflag, size = 0x8, scoped, tag = 'scoped memory for tpu_custom_call.1']
    #allocation5 [shape = 's32[2]{0}', space=sflag, size = 0x8, scoped, tag = 'scoped memory for tpu_custom_call.1']
    #allocation6 [shape = 'u8[65536]{0}', space=vmem, size = 0x10000, scoped, tag = 'input window, operand 1']
    #allocation7 [shape = 'u8[16384]{0}', space=vmem, size = 0x4000, scoped, tag = 'output window, operand 0']
    %7 = vsyncpa [#allocation5], 0
    %8 = vsyncpa [#allocation3], 0
    %s9 = scalar_lea.sflag [#allocation3], 1
    %10 = vsyncpa %s9, 0
    %11 = vsyncpa [#allocation4], 0
    %s12 = scalar_lea.sflag [#allocation4], 1
    %13 = vsyncpa %s12, 0
    loop: start=0, step=1, limit=4
    $region2: #{tpu_custom_call.1} parent=1 // loop_pre_header
      _
    $region3: #{tpu_custom_call.1} parent=1 // loop_header
      %s15 = sphi 0, %s19
      %p16 = scmp.ge.s32.totalorder %s15, 4
      %s23 = sphi 0, %s23
      %s25 = sphi 0, %s23
      %s26 = sphi 0, %s25
      %s40 = sphi 0, %s26
      %s46 = sphi 0, %s48
      %s49 = sphi 0, %s46
      %s50 = sphi 0, %s49
      %s66 = sphi 0, %s50
      %s72 = sphi 0, %s74
      %s75 = sphi 0, %s72
      %s76 = sphi 0, %s75
      %s92 = sphi 0, %s76
    $region4: #{tpu_custom_call.1} parent=1 // loop_header_branch
      %18 = sbr.rel (%p16) target = $region8
    $region5: #{tpu_custom_call.1} parent=1 // loop_body
      %s20 = ssub.s32 %s15, 1
      %s21 = ssub.s32 %s15, 2
      %s22 = sadd.s32 %s15, 1
      %s24 = sadd.s32 %s23, 1
      %p27 = scmp.eq.s32.totalorder %s15, 1
      %p28 = scmp.ne.s32.totalorder %s23, %s25
      %p29 = scmp.eq.s32.totalorder %s15, 0
      %p30 = por %p28, %p29
      %p31 = scmp.ne.s32.totalorder %s23, %s25
      %p32 = scmp.eq.s32.totalorder %s20, 1
      %p33 = por %p31, %p32
      %p34 = scmp.ne.s32.totalorder %s25, %s26
      %p35 = scmp.eq.s32.totalorder %s20, 0
      %p36 = por %p34, %p35
      %p37 = scmp.ne.s32.totalorder %s25, %s26
      %p38 = scmp.eq.s32.totalorder %s21, 1
      %p39 = por %p37, %p38
      %p41 = scmp.ne.s32.totalorder %s26, %s40
      %p42 = scmp.eq.s32.totalorder %s21, 0
      %p43 = por %p41, %p42
      %s44 = ssub.s32 %s15, %s22
      %p45 = scmp.eq.s32.totalorder %s44, 0
      %s47 = sadd.s32 %s46, 1
      %s48 = scalar_select %p45, %s46, %s47
      %p51 = pneg %p45
      %p52 = scmp.eq.s32.totalorder %s15, 1
      %p53 = por %p51, %p52
      %p54 = scmp.ne.s32.totalorder %s46, %s49
      %p55 = scmp.eq.s32.totalorder %s15, 0
      %p56 = por %p54, %p55
      %p57 = scmp.ne.s32.totalorder %s46, %s49
      %p58 = scmp.eq.s32.totalorder %s20, 1
      %p59 = por %p57, %p58
      %p60 = scmp.ne.s32.totalorder %s49, %s50
      %p61 = scmp.eq.s32.totalorder %s20, 0
      %p62 = por %p60, %p61
      %p63 = scmp.ne.s32.totalorder %s49, %s50
      %p64 = scmp.eq.s32.totalorder %s21, 1
      %p65 = por %p63, %p64
      %p67 = scmp.ne.s32.totalorder %s50, %s66
      %p68 = scmp.eq.s32.totalorder %s21, 0
      %p69 = por %p67, %p68
      %s70 = ssub.s32 %s15, %s22
      %p71 = scmp.eq.s32.totalorder %s70, 0
      %s73 = sadd.s32 %s72, 1
      %s74 = scalar_select %p71, %s72, %s73
      %p77 = pneg %p71
      %p78 = scmp.eq.s32.totalorder %s15, 1
      %p79 = por %p77, %p78
      %p80 = scmp.ne.s32.totalorder %s72, %s75
      %p81 = scmp.eq.s32.totalorder %s15, 0
      %p82 = por %p80, %p81
      %p83 = scmp.ne.s32.totalorder %s72, %s75
      %p84 = scmp.eq.s32.totalorder %s20, 1
      %p85 = por %p83, %p84
      %p86 = scmp.ne.s32.totalorder %s75, %s76
      %p87 = scmp.eq.s32.totalorder %s20, 0
      %p88 = por %p86, %p87
      %p89 = scmp.ne.s32.totalorder %s75, %s76
      %p90 = scmp.eq.s32.totalorder %s21, 1
      %p91 = por %p89, %p90
      %p93 = scmp.ne.s32.totalorder %s76, %s92
      %p94 = scmp.eq.s32.totalorder %s21, 0
      %p95 = por %p93, %p94
      %p96 = scmp.le.s32.totalorder 1, %s15
      %p97 = scmp.lt.s32.totalorder %s15, 3
      %p98 = pnand %p96, %p97
      %p99 = pneg %p98
      // Predicated region
      $region9: #{tpu_custom_call.1} parent=5 // pred_check
        _
      $region10: #{tpu_custom_call.1} parent=5 // pred_check_branch
        %101 = sbr.rel (%p98) target = $region12
      $region11: #{tpu_custom_call.1} parent=5 // pred_region
        %s102 = ssub.s32 %s15, 1
        // Predicated region
        $region13: #{tpu_custom_call.1} parent=11 // pred_check
          %p103 = pneg %p36
        $region14: #{tpu_custom_call.1} parent=11 // pred_check_branch
          %105 = sbr.rel (%p103) target = $region16
        $region15: #{tpu_custom_call.1} parent=11 // pred_region
          %s107 = ssub.s32 16, 16
          %108 = vsyncadd [#allocation5], %s107
          %111 = dma.hbm_to_smem %s0, 16, [#allocation2], [#allocation5]
        $region16: #{tpu_custom_call.1} parent=11 // pred_fallthru
          _
      $region12: #{tpu_custom_call.1} parent=5 // pred_fallthru
        _
      %p112 = scmp.lt.s32.totalorder %s15, 2
      // Predicated region
      $region17: #{tpu_custom_call.1} parent=5 // pred_check
        %p113 = pneg %p112
      $region18: #{tpu_custom_call.1} parent=5 // pred_check_branch
        %115 = sbr.rel (%p113) target = $region20
      $region19: #{tpu_custom_call.1} parent=5 // pred_region
        // Predicated region
        $region21: #{tpu_custom_call.1} parent=19 // pred_check
          %p116 = pneg %p56
        $region22: #{tpu_custom_call.1} parent=19 // pred_check_branch
          %118 = sbr.rel (%p116) target = $region24
        $region23: #{tpu_custom_call.1} parent=19 // pred_region
          %s119 = sand.u32 %s46, 1
          %s120 = scalar_lea.sflag [#allocation3], %s119
          %s121 = sand.u32 %s46, 1
          %s122 = smul.addr %s121, 64
          %s123 = scalar_lea.vmem [#allocation6], %s122
          %s124 = smul.u32 16, %s15
          %s126 = ssub.s32 1024, 1024
          %127 = vsyncadd %s120, %s126
          %s128 = smul.addr %s124, 64
          %s129 = scalar_lea.hbm %s1, %s128
          %s131 = sshll.u32 %s123, 4
          %s132 = int_to_ptr.vmem [resolvable:$true] %s131
          %134 = dma.hbm_to_vmem [thread:$0]  %s129, 1024, %s132, %s120
        $region24: #{tpu_custom_call.1} parent=19 // pred_fallthru
          _
      $region20: #{tpu_custom_call.1} parent=5 // pred_fallthru
        _
      %p135 = scmp.le.s32.totalorder 1, %s15
      %p136 = scmp.lt.s32.totalorder %s15, 3
      %p137 = pnand %p135, %p136
      %p138 = pneg %p137
      // Predicated region
      $region25: #{tpu_custom_call.1} parent=5 // pred_check
        _
      $region26: #{tpu_custom_call.1} parent=5 // pred_check_branch
        %140 = sbr.rel (%p137) target = $region28
      $region27: #{tpu_custom_call.1} parent=5 // pred_region
        %s141 = ssub.s32 %s15, 1
        // Predicated region
        $region29: #{tpu_custom_call.1} parent=27 // pred_check
          %p142 = pneg %p36
        $region30: #{tpu_custom_call.1} parent=27 // pred_check_branch
          %144 = sbr.rel (%p142) target = $region32
        $region31: #{tpu_custom_call.1} parent=27 // pred_region
          %145 = dma.done [#allocation5], 16
        $region32: #{tpu_custom_call.1} parent=27 // pred_fallthru
          _
        %s146 = sand.u32 %s49, 1
        %s147 = scalar_lea.sflag [#allocation3], %s146
        %s148 = sand.u32 %s49, 1
        %s149 = smul.addr %s148, 64
        %s150 = scalar_lea.vmem [#allocation6], %s149
        // Predicated region
        $region33: #{tpu_custom_call.1} parent=27 // pred_check
          %p151 = pneg %p62
        $region34: #{tpu_custom_call.1} parent=27 // pred_check_branch
          %153 = sbr.rel (%p151) target = $region36
        $region35: #{tpu_custom_call.1} parent=27 // pred_region
          %154 = dma.done %s147, 1024
        $region36: #{tpu_custom_call.1} parent=27 // pred_fallthru
          _
        %155 = sfence
        %p156 = pneg %p36
        %p157 = pneg %p33
        %s158 = sand.u32 %s49, 1
        %s159 = scalar_lea.sflag [#allocation3], %s158
        %s160 = sand.u32 %s49, 1
        %s161 = smul.addr %s160, 64
        %s162 = scalar_lea.vmem [#allocation6], %s161
        %p163 = pneg %p62
        %p164 = pneg %p59
        %p165 = pneg %p88
        %p166 = pneg %p85
        %s167 = sand.u32 %s75, 1
        %s168 = scalar_lea.sflag [#allocation4], %s167
        %s169 = sand.u32 %s75, 1
        %s170 = smul.addr %s169, 16
        %s171 = scalar_lea.vmem [#allocation7], %s170
        %s172 = smul.u32 16, %s20
        %s173 = smul.u32 16, %s20
        %v174 = vld [vmem:[%s150] ss:$4 sm:$0xff]
        %s175 = scalar_lea.vmem %s150, 32 [#allocation6]
        %v176 = vld [vmem:[%s175] ss:$4 sm:$0xff]
        %s177 = scalar_lea.vmem %s150, 1 [#allocation6]
        %v178 = vld [vmem:[%s177] ss:$4 sm:$0xff]
        %s179 = scalar_lea.vmem %s150, 33 [#allocation6]
        %v180 = vld [vmem:[%s179] ss:$4 sm:$0xff]
        %s181 = scalar_lea.vmem %s150, 2 [#allocation6]
        %v182 = vld [vmem:[%s181] ss:$4 sm:$0xff]
        %s183 = scalar_lea.vmem %s150, 34 [#allocation6]
        %v184 = vld [vmem:[%s183] ss:$4 sm:$0xff]
        %s185 = sld [smem:[#allocation2]]
        %v186 = vstv %s185
        %v187 = vmul.f32 %v186, %v174
        %v188 = vmul.f32 %v186, %v176
        %s189 = sld [smem:[#allocation2 + $0x1]]
        %v190 = vstv %s189
        %v191 = vmul.f32 %v190, %v178
        %v192 = vmul.f32 %v190, %v180
        %v193 = vadd.f32 %v187, %v191
        %v194 = vadd.f32 %v188, %v192
        %s195 = sld [smem:[#allocation2 + $0x2]]
        %v196 = vstv %s195
        %v197 = vmul.f32 %v196, %v182
        %v198 = vmul.f32 %v196, %v184
        %v199 = vadd.f32 %v193, %v197
        %v200 = vadd.f32 %v194, %v198
        %s201 = sld [smem:[#allocation2 + $0x6]]
        %v202 = vstv %s201
        %v203 = vadd.f32 %v199, %v202
        %v204 = vadd.f32 %v200, %v202
        %s205 = sld [smem:[#allocation2 + $0x3]]
        %v206 = vstv %s205
        %v207 = vmul.f32 %v206, %v174
        %v208 = vmul.f32 %v206, %v176
        %s209 = sld [smem:[#allocation2 + $0x4]]
        %v210 = vstv %s209
        %v211 = vmul.f32 %v210, %v178
        %v212 = vmul.f32 %v210, %v180
        %v213 = vadd.f32 %v207, %v211
        %v214 = vadd.f32 %v208, %v212
        %s215 = sld [smem:[#allocation2 + $0x5]]
        %v216 = vstv %s215
        %v217 = vmul.f32 %v216, %v182
        %v218 = vmul.f32 %v216, %v184
        %v219 = vadd.f32 %v213, %v217
        %v220 = vadd.f32 %v214, %v218
        %s221 = sld [smem:[#allocation2 + $0x7]]
        %v222 = vstv %s221
        %v223 = vadd.f32 %v219, %v222
        %v224 = vadd.f32 %v220, %v222
        %v225 = vmax.f32 %v203, 0.0
        %v226 = vmax.f32 %v204, 0.0
        %v227 = vmax.f32 %v223, 0.0
        %v228 = vmax.f32 %v224, 0.0
        %s229 = sld [smem:[#allocation2 + $0x8]]
        %v230 = vstv %s229
        %v231 = vmul.f32 %v225, %v230
        %v232 = vmul.f32 %v226, %v230
        %s233 = sld [smem:[#allocation2 + $0x9]]
        %v234 = vstv %s233
        %v235 = vmul.f32 %v227, %v234
        %v236 = vmul.f32 %v228, %v234
        %v237 = vadd.f32 %v231, %v235
        %v238 = vadd.f32 %v232, %v236
        %s239 = sld [smem:[#allocation2 + $0xa]]
        %v240 = vstv %s239
        %v241 = vadd.f32 %v237, %v240
        %v242 = vadd.f32 %v238, %v240
        %243 = vst [vmem:[%s171] sm:$0xff] %v241
        %244 = vst [vmem:[%s171 + $0x8] sm:$0xff] %v242
        %s245 = sand.u32 %s75, 1
        %s246 = scalar_lea.sflag [#allocation4], %s245
        %s247 = sand.u32 %s75, 1
        %s248 = smul.addr %s247, 16
        %s249 = scalar_lea.vmem [#allocation7], %s248
        // Predicated region
        $region37: #{tpu_custom_call.1} parent=27 // pred_check
          %p250 = pneg %p85
        $region38: #{tpu_custom_call.1} parent=27 // pred_check_branch
          %252 = sbr.rel (%p250) target = $region40
        $region39: #{tpu_custom_call.1} parent=27 // pred_region
          %s253 = smul.u32 16, %s20
          %s255 = ssub.s32 256, 256
          %256 = vsyncadd %s246, %s255
          %s257 = smul.addr %s253, 16
          %s258 = scalar_lea.hbm %s2, %s257
          %s260 = sshll.u32 %s249, 4
          %s261 = int_to_ptr.vmem [resolvable:$true] %s260
          %263 = dma.vmem_to_hbm [thread:$0]  %s261, 256, %s258, %s246
        $region40: #{tpu_custom_call.1} parent=27 // pred_fallthru
          _
      $region28: #{tpu_custom_call.1} parent=5 // pred_fallthru
        _
      %p264 = scmp.le.s32.totalorder 2, %s15
      // Predicated region
      $region41: #{tpu_custom_call.1} parent=5 // pred_check
        %p265 = pneg %p264
      $region42: #{tpu_custom_call.1} parent=5 // pred_check_branch
        %267 = sbr.rel (%p265) target = $region44
      $region43: #{tpu_custom_call.1} parent=5 // pred_region
        %s268 = ssub.s32 %s15, 2
        // Predicated region
        $region45: #{tpu_custom_call.1} parent=43 // pred_check
          %p269 = pneg %p91
        $region46: #{tpu_custom_call.1} parent=43 // pred_check_branch
          %271 = sbr.rel (%p269) target = $region48
        $region47: #{tpu_custom_call.1} parent=43 // pred_region
          %s272 = sand.u32 %s76, 1
          %s273 = scalar_lea.sflag [#allocation4], %s272
          %s274 = sand.u32 %s76, 1
          %s275 = smul.addr %s274, 16
          %s276 = scalar_lea.vmem [#allocation7], %s275
          %277 = dma.done %s273, 256
        $region48: #{tpu_custom_call.1} parent=43 // pred_fallthru
          _
      $region44: #{tpu_custom_call.1} parent=5 // pred_fallthru
        _
    $region6: #{tpu_custom_call.1} parent=1 // loop_footer
      %s19 = sadd.s32 1, %s15
    $region7: #{tpu_custom_call.1} parent=1 // loop_footer_branch
      %14 = sbr.rel target = $region3
    $region8: #{tpu_custom_call.1} parent=1 // loop_exit
      _
    %278 = vsyncpa [#allocation3], 1
    %s279 = scalar_lea.sflag [#allocation3], 1
    %280 = vsyncpa %s279, 1
    %281 = vsyncpa [#allocation4], 1
    %s282 = scalar_lea.sflag [#allocation4], 1
    %283 = vsyncpa %s282, 1
    %284 = vsyncpa [#allocation5], 1
    %s285 = scalar_lea.sflag [#allocation5], 1
    %286 = vsyncpa %s285, 1

</llo_original>
